<compile_context>
chip_gen: v5e
topology: v5e:2x2
jax: 0.10.0
libtpu: 0.0.40
codegen_flags: <defaults>
</compile_context>

<pallas_src>
import math
import functools

import jax
import jax.numpy as jnp
from jax import lax
from jax.experimental import pallas as pl
from jax.experimental.pallas import tpu as pltpu


def _embed_kernel(ids_ref, table_ref, out_ref, *, scale, block_tokens, vocab):
    # ids_ref:   (n_pad,) int32 token ids, full array in SMEM (scalar prefetch).
    # table_ref: (vocab, d_model) embedding table, VMEM-resident across steps.
    # out_ref:   (block_tokens, d_model) output block.
    base = pl.program_id(0) * block_tokens
    n_groups = block_tokens // 8  # block_tokens is always a multiple of 8

    def body(g, carry):
        off = pl.multiple_of(g * 8, 8)
        rows = []
        for j in range(8):
            tok = ids_ref[base + off + j]
            # Clamp: an OOB id would otherwise read stale/foreign VMEM (no HW
            # bounds check on VMEM loads). PyTorch raises; here we clamp.
            tok = jnp.clip(tok, 0, vocab - 1)
            rows.append(table_ref[pl.ds(tok, 1), :])        # (1, d_model)
        tile = jnp.concatenate(rows, axis=0)                # (8, d_model)
        # 8-aligned sublane offset -> dense unmasked store, lane-dense d_model.
        out_ref[pl.ds(off, 8), :] = (tile * scale).astype(out_ref.dtype)
        return carry

    lax.fori_loop(0, n_groups, body, 0)


def embeddings_forward(token_ids, emb_table, *, block_tokens=512):
    """Pallas equivalent of Embeddings.forward: emb_table[token_ids] * sqrt(d_model).

    Out-of-range token ids are clamped (PyTorch raises); padded ids (=0) gather
    row 0 and are sliced off.
    """
    B, S = token_ids.shape
    vocab, d_model = emb_table.shape
    n_tok = B * S

    # Tokens per grid step: multiple of 8 (sublane granularity), no larger
    # than the padded token count (avoids wasted gather iterations).
    T = min(block_tokens, pl.cdiv(n_tok, 8) * 8)
    T = max(8, (T // 8) * 8)
    n_blocks = pl.cdiv(n_tok, T)
    n_pad = n_blocks * T

    # Per-chip VMEM budget. The pipeline may double-buffer even a
    # constant-index input, so budget 2x the table.
    vmem_cap = 64 << 20  # v7x per-TensorCore VMEM: the tightest generation.
    try:
        cap = getattr(pltpu.get_tpu_info(), "vmem_capacity_bytes", None)
        if cap:
            vmem_cap = int(cap)
    except Exception:
        pass

    table_bytes = vocab * d_model * emb_table.dtype.itemsize
    out_block_bytes = T * d_model * emb_table.dtype.itemsize
    if 2 * table_bytes + 2 * out_block_bytes + (4 << 20) > vmem_cap:
        # TODO(synk): large-vocab path — keep the table in HBM (memory_space=pl.ANY)
        # and gather rows with multi-outstanding manual make_async_copy DMAs.
        raise NotImplementedError("embedding table too large for the VMEM-resident path")

    flat_ids = token_ids.reshape(n_tok).astype(jnp.int32)
    flat_ids = jnp.pad(flat_ids, (0, n_pad - n_tok))  # pad ids = 0 (in-bounds, sliced off)

    scale = float(math.sqrt(d_model))
    kernel = functools.partial(_embed_kernel, scale=scale, block_tokens=T, vocab=vocab)

    vmem_limit = int(min(max(2 * table_bytes + 2 * out_block_bytes + (8 << 20), 32 << 20),
                         int(vmem_cap * 0.9)))

    out_flat = pl.pallas_call(
        kernel,
        out_shape=jax.ShapeDtypeStruct((n_pad, d_model), emb_table.dtype),
        grid_spec=pltpu.PrefetchScalarGridSpec(
            num_scalar_prefetch=1,  # token ids -> SMEM; also visible to index_maps
            grid=(n_blocks,),
            in_specs=[
                # Full table, constant block index -> DMA'd from HBM once, resident.
                pl.BlockSpec((vocab, d_model), lambda i, ids: (0, 0)),
            ],
            out_specs=pl.BlockSpec((T, d_model), lambda i, ids: (i, 0)),
        ),
        compiler_params=pltpu.CompilerParams(
            dimension_semantics=("parallel",),
            vmem_limit_bytes=vmem_limit,
        ),
    )(flat_ids, emb_table)

    return out_flat[:n_tok].reshape(B, S, d_model)


if __name__ == "__main__":
    # Small shapes consistent with the module: vocab=64, d_model=128, batch=2, seq=8.
    d_model = 128
    vocab = 64
    B, S = 2, 8

    key = jax.random.PRNGKey(0)
    k_emb, k_ids = jax.random.split(key)

    # nn.Embedding default init: N(0, 1)
    emb_table = jax.random.normal(k_emb, (vocab, d_model), dtype=jnp.float32)
    token_ids = jax.random.randint(k_ids, (B, S), minval=0, maxval=vocab, dtype=jnp.int32)

    out = embeddings_forward(token_ids, emb_table)
    out = jax.block_until_ready(out)

    # Reference check (plain JAX): table[x] * sqrt(d_model). Gather is exact f32.
    ref = jnp.take(emb_table, token_ids.reshape(-1), axis=0).reshape(B, S, d_model) * math.sqrt(d_model)
    assert out.shape == (B, S, d_model)
    assert out.dtype == emb_table.dtype
    assert jnp.allclose(out, ref, rtol=1e-6, atol=1e-6), "mismatch vs reference"

    print("KERNEL_OK")
</pallas_src>

<mosaic_0001>
module attributes {stable_mosaic.version = 11 : i64} {
  func.func @_embed_kernel(%arg0: i32, %arg1: memref<16xi32, #tpu.memory_space<smem>>, %arg2: memref<64x128xf32, #tpu.memory_space<vmem>>, %arg3: memref<16x128xf32, #tpu.memory_space<vmem>>) attributes {dimension_semantics = [#tpu.dimension_semantics<parallel>], iteration_bounds = array<i64: 1>, scalar_prefetch = 1 : i64, scratch_operands = 0 : i64, tpu.core_type = #tpu.core_type<tc>, window_params = [{pipeline_mode = #tpu.pipeline_mode<synchronous>, transform_indices = @transform_0, window_bounds = array<i64: 64, 128>}, {transform_indices = @transform_1, window_bounds = array<i64: 16, 128>}]} {
    %c16_i32 = arith.constant 16 : i32
    %0 = arith.muli %arg0, %c16_i32 : i32
    %c0_i32 = arith.constant 0 : i32
    %c2_i32 = arith.constant 2 : i32
    %1 = arith.addi %c0_i32, %c2_i32 : i32
    %c1_i32 = arith.constant 1 : i32
    scf.for %arg4 = %c0_i32 to %1 step %c1_i32  : i32 {
      %c8_i32 = arith.constant 8 : i32
      %2 = arith.muli %arg4, %c8_i32 : i32
      %3 = tpu.assume_multiple %2, 8 : i32
      %4 = arith.addi %0, %3 : i32
      %c0_i32_1 = arith.constant 0 : i32
      %5 = arith.addi %4, %c0_i32_1 : i32
      %6 = arith.index_cast %5 : i32 to index
      %7 = memref.load %arg1[%6] : memref<16xi32, #tpu.memory_space<smem>>
      %c0_i32_2 = arith.constant 0 : i32
      %c63_i32 = arith.constant 63 : i32
      %8 = arith.maxsi %c0_i32_2, %7 : i32
      %9 = arith.minsi %c63_i32, %8 : i32
      %10 = arith.index_cast %9 : i32 to index
      %c0 = arith.constant 0 : index
      %11 = vector.load %arg2[%10, %c0] : memref<64x128xf32, #tpu.memory_space<vmem>>, vector<1x128xf32>
      %12 = arith.addi %0, %3 : i32
      %c1_i32_3 = arith.constant 1 : i32
      %13 = arith.addi %12, %c1_i32_3 : i32
      %14 = arith.index_cast %13 : i32 to index
      %15 = memref.load %arg1[%14] : memref<16xi32, #tpu.memory_space<smem>>
      %c0_i32_4 = arith.constant 0 : i32
      %c63_i32_5 = arith.constant 63 : i32
      %16 = arith.maxsi %c0_i32_4, %15 : i32
      %17 = arith.minsi %c63_i32_5, %16 : i32
      %18 = arith.index_cast %17 : i32 to index
      %c0_6 = arith.constant 0 : index
      %19 = vector.load %arg2[%18, %c0_6] : memref<64x128xf32, #tpu.memory_space<vmem>>, vector<1x128xf32>
      %20 = arith.addi %0, %3 : i32
      %c2_i32_7 = arith.constant 2 : i32
      %21 = arith.addi %20, %c2_i32_7 : i32
      %22 = arith.index_cast %21 : i32 to index
      %23 = memref.load %arg1[%22] : memref<16xi32, #tpu.memory_space<smem>>
      %c0_i32_8 = arith.constant 0 : i32
      %c63_i32_9 = arith.constant 63 : i32
      %24 = arith.maxsi %c0_i32_8, %23 : i32
      %25 = arith.minsi %c63_i32_9, %24 : i32
      %26 = arith.index_cast %25 : i32 to index
      %c0_10 = arith.constant 0 : index
      %27 = vector.load %arg2[%26, %c0_10] : memref<64x128xf32, #tpu.memory_space<vmem>>, vector<1x128xf32>
      %28 = arith.addi %0, %3 : i32
      %c3_i32 = arith.constant 3 : i32
      %29 = arith.addi %28, %c3_i32 : i32
      %30 = arith.index_cast %29 : i32 to index
      %31 = memref.load %arg1[%30] : memref<16xi32, #tpu.memory_space<smem>>
      %c0_i32_11 = arith.constant 0 : i32
      %c63_i32_12 = arith.constant 63 : i32
      %32 = arith.maxsi %c0_i32_11, %31 : i32
      %33 = arith.minsi %c63_i32_12, %32 : i32
      %34 = arith.index_cast %33 : i32 to index
      %c0_13 = arith.constant 0 : index
      %35 = vector.load %arg2[%34, %c0_13] : memref<64x128xf32, #tpu.memory_space<vmem>>, vector<1x128xf32>
      %36 = arith.addi %0, %3 : i32
      %c4_i32 = arith.constant 4 : i32
      %37 = arith.addi %36, %c4_i32 : i32
      %38 = arith.index_cast %37 : i32 to index
      %39 = memref.load %arg1[%38] : memref<16xi32, #tpu.memory_space<smem>>
      %c0_i32_14 = arith.constant 0 : i32
      %c63_i32_15 = arith.constant 63 : i32
      %40 = arith.maxsi %c0_i32_14, %39 : i32
      %41 = arith.minsi %c63_i32_15, %40 : i32
      %42 = arith.index_cast %41 : i32 to index
      %c0_16 = arith.constant 0 : index
      %43 = vector.load %arg2[%42, %c0_16] : memref<64x128xf32, #tpu.memory_space<vmem>>, vector<1x128xf32>
      %44 = arith.addi %0, %3 : i32
      %c5_i32 = arith.constant 5 : i32
      %45 = arith.addi %44, %c5_i32 : i32
      %46 = arith.index_cast %45 : i32 to index
      %47 = memref.load %arg1[%46] : memref<16xi32, #tpu.memory_space<smem>>
      %c0_i32_17 = arith.constant 0 : i32
      %c63_i32_18 = arith.constant 63 : i32
      %48 = arith.maxsi %c0_i32_17, %47 : i32
      %49 = arith.minsi %c63_i32_18, %48 : i32
      %50 = arith.index_cast %49 : i32 to index
      %c0_19 = arith.constant 0 : index
      %51 = vector.load %arg2[%50, %c0_19] : memref<64x128xf32, #tpu.memory_space<vmem>>, vector<1x128xf32>
      %52 = arith.addi %0, %3 : i32
      %c6_i32 = arith.constant 6 : i32
      %53 = arith.addi %52, %c6_i32 : i32
      %54 = arith.index_cast %53 : i32 to index
      %55 = memref.load %arg1[%54] : memref<16xi32, #tpu.memory_space<smem>>
      %c0_i32_20 = arith.constant 0 : i32
      %c63_i32_21 = arith.constant 63 : i32
      %56 = arith.maxsi %c0_i32_20, %55 : i32
      %57 = arith.minsi %c63_i32_21, %56 : i32
      %58 = arith.index_cast %57 : i32 to index
      %c0_22 = arith.constant 0 : index
      %59 = vector.load %arg2[%58, %c0_22] : memref<64x128xf32, #tpu.memory_space<vmem>>, vector<1x128xf32>
      %60 = arith.addi %0, %3 : i32
      %c7_i32 = arith.constant 7 : i32
      %61 = arith.addi %60, %c7_i32 : i32
      %62 = arith.index_cast %61 : i32 to index
      %63 = memref.load %arg1[%62] : memref<16xi32, #tpu.memory_space<smem>>
      %c0_i32_23 = arith.constant 0 : i32
      %c63_i32_24 = arith.constant 63 : i32
      %64 = arith.maxsi %c0_i32_23, %63 : i32
      %65 = arith.minsi %c63_i32_24, %64 : i32
      %66 = arith.index_cast %65 : i32 to index
      %c0_25 = arith.constant 0 : index
      %67 = vector.load %arg2[%66, %c0_25] : memref<64x128xf32, #tpu.memory_space<vmem>>, vector<1x128xf32>
      %68 = tpu.concatenate %11, %19, %27, %35, %43, %51, %59, %67 in 0 : vector<1x128xf32>, vector<1x128xf32>, vector<1x128xf32>, vector<1x128xf32>, vector<1x128xf32>, vector<1x128xf32>, vector<1x128xf32>, vector<1x128xf32> -> vector<8x128xf32>
      %cst = arith.constant 11.3137083 : f32
      %69 = vector.broadcast %cst : f32 to vector<8x128xf32>
      %70 = arith.mulf %68, %69 : vector<8x128xf32>
      %71 = arith.index_cast %3 : i32 to index
      %c0_26 = arith.constant 0 : index
      %72 = vector.load %arg3[%71, %c0_26] : memref<16x128xf32, #tpu.memory_space<vmem>>, vector<8x128xf32>
      tpu.vector_store %arg3[%71, %c0_26], %70 {strides = array<i32>} : memref<16x128xf32, #tpu.memory_space<vmem>>, vector<8x128xf32>,
    }
    %c2_i32_0 = arith.constant 2 : i32
    return
  }
  func.func @transform_0(%arg0: i32, %arg1: memref<16xi32, #tpu.memory_space<smem>>) -> (i32, i32) {
    %c0_i32 = arith.constant 0 : i32
    %c0_i32_0 = arith.constant 0 : i32
    %c0_i32_1 = arith.constant 0 : i32
    return %c0_i32, %c0_i32_0 : i32, i32
  }
  func.func @transform_1(%arg0: i32, %arg1: memref<16xi32, #tpu.memory_space<smem>>) -> (i32, i32) {
    %c0_i32 = arith.constant 0 : i32
    %c0_i32_0 = arith.constant 0 : i32
    return %arg0, %c0_i32 : i32, i32
  }
}

</mosaic_0001>

<llo_original>
// kernel: tpu_custom_call.1
$region0: #{tpu_custom_call.1}
  #allocation0 [shape = 'u32[]', space=smem, size = 0x4, offset = 0x4, fixed_abs, tag = 'smem constant byte address 0x4 - core index']
  #allocation1 [shape = 'u32[72,128]{1,0:T(1,128)}', space=vmem, size = 0x9000, scoped, tag = 'internal scratch']
  #allocation2 [shape = 's32[1]{0}', space=sflag, size = 0x4, scoped, tag = 'scoped memory for tpu_custom_call.1']
  #allocation3 [shape = 'u8[512]{0}', space=smem, size = 0x200, scoped, tag = 'prefetched SMEM operand 0']
  %s0 = inlined_call_operand.hbm [shape: s32[16], index: 0, kind: input, shape index: {}]
  %s1 = inlined_call_operand.hbm [shape: f32[64,128], index: 1, kind: input, shape index: {}]
  %s2 = inlined_call_operand.hbm [shape: f32[16,128], index: 2, kind: output, shape index: {}]
  %s3 = sld [smem:[#allocation0]]
  $region25: #{tpu_custom_call.1} parent=0
    _
  %s5 = ssub.s32 1, %s3
  %s6 = scalar_select 0, %s5, %s3
  %s8 = sshll.u32 %s0, 4
  %s9 = int_to_ptr.hbm [resolvable:$true] %s8
  %11 = dma.hbm_to_smem %s9, 16, [#allocation3], [#allocation2]
  %13 = dma.done [#allocation2], 16
  %14 = sfence
  $region1: #{tpu_custom_call.1} parent=0
    #allocation4 [shape = 'u8[32768]{0}', space=vmem, size = 0x8000, scoped, tag = 'input window, operand 1, single buffered']
    #allocation5 [shape = 's32[1]{0}', space=sflag, size = 0x4, scoped, tag = 'scoped memory for tpu_custom_call.1']
    #allocation6 [shape = 's32[1]{0}', space=sflag, size = 0x4, scoped, tag = 'scoped memory for tpu_custom_call.1']
    #allocation7 [shape = 'u8[8192]{0}', space=vmem, size = 0x2000, scoped, tag = 'output window, operand 0, single buffered']
    %15 = vsyncpa [#allocation5], 0
    %16 = vsyncpa [#allocation6], 0
    // Predicated region
    $region2: #{tpu_custom_call.1} parent=1 // pred_check
      _
    $region3: #{tpu_custom_call.1} parent=1 // pred_check_branch
      %18 = sbr.rel (0) target = $region5
    $region4: #{tpu_custom_call.1} parent=1 // pred_region
      %20 = vsyncadd [#allocation5], 0
      %s21 = sshll.u32 %s1, 4
      %s22 = int_to_ptr.hbm [resolvable:$true] %s21
      %s23 = sshll.u32 [#allocation4], 4
      %s24 = int_to_ptr.vmem [resolvable:$true] %s23
      %29 = dma.hbm_to_vmem [thread:$0]  %s22, 1024, %s24, [#allocation5], 128, 128, 8
    $region5: #{tpu_custom_call.1} parent=1 // pred_fallthru
      _
    // Predicated region
    $region6: #{tpu_custom_call.1} parent=1 // pred_check
      _
    $region7: #{tpu_custom_call.1} parent=1 // pred_check_branch
      %31 = sbr.rel (0) target = $region9
    $region8: #{tpu_custom_call.1} parent=1 // pred_region
      %33 = dma.done [#allocation5], 1024
    $region9: #{tpu_custom_call.1} parent=1 // pred_fallthru
      _
    %s34 = smul.u32 0, 16
    loop: start=0, step=1, limit=2
    $region10: #{tpu_custom_call.1} parent=1 // loop_pre_header
      _
    $region11: #{tpu_custom_call.1} parent=1 // loop_header
      %s36 = sphi 0, %s40
      %p37 = scmp.ge.s32.totalorder %s36, 2
    $region12: #{tpu_custom_call.1} parent=1 // loop_header_branch
      %39 = sbr.rel (%p37) target = $region16
    $region13: #{tpu_custom_call.1} parent=1 // loop_body
      %s41 = smul.u32 %s36, 8
      %s42 = sadd.s32 %s34, %s41
      %s43 = sld [smem:[#allocation3 + %s42]]
      %p44 = scmp.gt.s32.totalorder %s43, 0
      %s45 = scalar_select %p44, %s43, 0
      %p46 = scmp.lt.s32.totalorder %s45, 63
      %s47 = scalar_select %p46, %s45, 63
      %s48 = scalar_lea.vmem [#allocation4], %s47
      %v49 = vld [vmem:[%s48] sm:$0x1]
      %s50 = sadd.s32 %s42, 1
      %s51 = sld [smem:[#allocation3 + %s50]]
      %p52 = scmp.gt.s32.totalorder %s51, 0
      %s53 = scalar_select %p52, %s51, 0
      %p54 = scmp.lt.s32.totalorder %s53, 63
      %s55 = scalar_select %p54, %s53, 63
      %s56 = scalar_lea.vmem [#allocation4], %s55
      %v57 = vld [vmem:[%s56] sm:$0x1]
      %s58 = sadd.s32 %s42, 2
      %s59 = sld [smem:[#allocation3 + %s58]]
      %p60 = scmp.gt.s32.totalorder %s59, 0
      %s61 = scalar_select %p60, %s59, 0
      %p62 = scmp.lt.s32.totalorder %s61, 63
      %s63 = scalar_select %p62, %s61, 63
      %s64 = scalar_lea.vmem [#allocation4], %s63
      %v65 = vld [vmem:[%s64] sm:$0x1]
      %s66 = sadd.s32 %s42, 3
      %s67 = sld [smem:[#allocation3 + %s66]]
      %p68 = scmp.gt.s32.totalorder %s67, 0
      %s69 = scalar_select %p68, %s67, 0
      %p70 = scmp.lt.s32.totalorder %s69, 63
      %s71 = scalar_select %p70, %s69, 63
      %s72 = scalar_lea.vmem [#allocation4], %s71
      %v73 = vld [vmem:[%s72] sm:$0x1]
      %s74 = sadd.s32 %s42, 4
      %s75 = sld [smem:[#allocation3 + %s74]]
      %p76 = scmp.gt.s32.totalorder %s75, 0
      %s77 = scalar_select %p76, %s75, 0
      %p78 = scmp.lt.s32.totalorder %s77, 63
      %s79 = scalar_select %p78, %s77, 63
      %s80 = scalar_lea.vmem [#allocation4], %s79
      %v81 = vld [vmem:[%s80] sm:$0x1]
      %s82 = sadd.s32 %s42, 5
      %s83 = sld [smem:[#allocation3 + %s82]]
      %p84 = scmp.gt.s32.totalorder %s83, 0
      %s85 = scalar_select %p84, %s83, 0
      %p86 = scmp.lt.s32.totalorder %s85, 63
      %s87 = scalar_select %p86, %s85, 63
      %s88 = scalar_lea.vmem [#allocation4], %s87
      %v89 = vld [vmem:[%s88] sm:$0x1]
      %s90 = sadd.s32 %s42, 6
      %s91 = sld [smem:[#allocation3 + %s90]]
      %p92 = scmp.gt.s32.totalorder %s91, 0
      %s93 = scalar_select %p92, %s91, 0
      %p94 = scmp.lt.s32.totalorder %s93, 63
      %s95 = scalar_select %p94, %s93, 63
      %s96 = scalar_lea.vmem [#allocation4], %s95
      %v97 = vld [vmem:[%s96] sm:$0x1]
      %s98 = sadd.s32 %s42, 7
      %s99 = sld [smem:[#allocation3 + %s98]]
      %p100 = scmp.gt.s32.totalorder %s99, 0
      %s101 = scalar_select %p100, %s99, 0
      %p102 = scmp.lt.s32.totalorder %s101, 63
      %s103 = scalar_select %p102, %s101, 63
      %s104 = scalar_lea.vmem [#allocation4], %s103
      %v105 = vld [vmem:[%s104] sm:$0x1]
      %v107 = vrot.slane %v57, 7
      %v110 = vrot.slane %v65, 6
      %v113 = vrot.slane %v73, 5
      %v116 = vrot.slane %v81, 4
      %v119 = vrot.slane %v89, 3
      %v122 = vrot.slane %v97, 2
      %v125 = vrot.slane %v105, 1
      %vm127 = vcmask 1040384
      %v128 = vsel %vm127, %v49, %v107
      %vm129 = vcmask 1041408
      %v130 = vsel %vm129, %v128, %v110
      %vm131 = vcmask 1042432
      %v132 = vsel %vm131, %v130, %v113
      %vm133 = vcmask 1043456
      %v134 = vsel %vm133, %v132, %v116
      %vm135 = vcmask 1044480
      %v136 = vsel %vm135, %v134, %v119
      %vm137 = vcmask 1045504
      %v138 = vsel %vm137, %v136, %v122
      %vm139 = vcmask 1046528
      %v140 = vsel %vm139, %v138, %v125
      %v141 = vmul.f32 %v140, 11.313708
      %s142 = scalar_lea.vmem [#allocation7], %s41
      %143 = vst [vmem:[%s142] sm:$0xff] %v141
    $region14: #{tpu_custom_call.1} parent=1 // loop_footer
      %s40 = sadd.s32 1, %s36
    $region15: #{tpu_custom_call.1} parent=1 // loop_footer_branch
      %35 = sbr.rel target = $region11
    $region16: #{tpu_custom_call.1} parent=1 // loop_exit
      _
    // Predicated region
    $region17: #{tpu_custom_call.1} parent=1 // pred_check
      _
    $region18: #{tpu_custom_call.1} parent=1 // pred_check_branch
      %145 = sbr.rel (0) target = $region20
    $region19: #{tpu_custom_call.1} parent=1 // pred_region
      %147 = vsyncadd [#allocation6], 0
      %s148 = sshll.u32 [#allocation7], 4
      %s149 = int_to_ptr.vmem [resolvable:$true] %s148
      %s150 = sshll.u32 %s2, 4
      %s151 = int_to_ptr.hbm [resolvable:$true] %s150
      %156 = dma.vmem_to_hbm [thread:$0]  %s149, 256, %s151, [#allocation6], 128, 128, 8
    $region20: #{tpu_custom_call.1} parent=1 // pred_fallthru
      _
    // Predicated region
    $region21: #{tpu_custom_call.1} parent=1 // pred_check
      _
    $region22: #{tpu_custom_call.1} parent=1 // pred_check_branch
      %158 = sbr.rel (0) target = $region24
    $region23: #{tpu_custom_call.1} parent=1 // pred_region
      %160 = dma.done [#allocation6], 256
    $region24: #{tpu_custom_call.1} parent=1 // pred_fallthru
      _
    %161 = vsyncpa [#allocation5], 1
    %162 = vsyncpa [#allocation6], 1

</llo_original>
